<compile_context>
chip_gen: v6e
topology: v6e:2x2x1
jax: 0.10.0
libtpu: 0.0.40
codegen_flags: <defaults>
</compile_context>

<pallas_src>
import functools

import jax
import jax.numpy as jnp
import numpy as np
from jax.experimental import pallas as pl
from jax.experimental.pallas import tpu as pltpu

THRESH = 0.5
MARGIN = 0.1
EPSILON = 1e-5


def _round_up(x, m):
    return (x + m - 1) // m * m


def _vmem_capacity_bytes():
    """Physical per-TensorCore VMEM; conservative 64 MiB (v7x) fallback."""
    try:
        return int(getattr(pltpu.get_tpu_info(), "vmem_capacity_bytes"))
    except Exception:
        return 64 * 2**20


def _ms_loss_kernel(lhs_ref, rhs_ref, lab_col_ref, lab_row_ref, out_ref, *,
                    scale_pos, scale_neg, block_rows, batch):
    """One grid step = rows [i*block_rows, (i+1)*block_rows) of the loss.

    lhs_ref     : (TM, D_pad)    row tile of feats (pipelined per-step DMA).
    rhs_ref     : (D_pad, B_pad) pre-transposed feats, VMEM-resident.
    lab_col_ref : (TM, 1)  int32 label column tile (pipelined per-step DMA).
    lab_row_ref : (1, B_pad) int32 labels, VMEM-resident.
    out_ref     : (1, 1) SMEM scalar -> partial sum of row losses.
    """
    i = pl.program_id(0)
    row_start = i * block_rows

    # Canonical [M,K]x[K,N] Gram slab on the MXU, accumulated in f32.
    sim = jax.lax.dot_general(
        lhs_ref[...], rhs_ref[...],
        dimension_numbers=(((1,), (0,)), ((), ())),
        preferred_element_type=jnp.float32)                    # (TM, B_pad)

    b_pad = sim.shape[1]

    # Masks for padded rows / columns (batch is the real, unpadded size).
    col_valid = jax.lax.broadcasted_iota(jnp.int32, (1, b_pad), 1) < batch
    row_valid = (jax.lax.broadcasted_iota(jnp.int32, (block_rows, 1), 0)
                 + row_start) < batch

    eq = lab_col_ref[...] == lab_row_ref[...]                  # (TM, B_pad)
    pos_mask = jnp.logical_and(
        jnp.logical_and(eq, sim < (1.0 - EPSILON)), col_valid)
    neg_mask = jnp.logical_and(jnp.logical_not(eq), col_valid)

    inf = jnp.float32(jnp.inf)
    min_pos = jnp.min(jnp.where(pos_mask, sim, inf), axis=-1, keepdims=True)
    max_neg = jnp.max(jnp.where(neg_mask, sim, -inf), axis=-1, keepdims=True)

    pos_sel = jnp.logical_and(pos_mask, sim - MARGIN < max_neg)
    neg_sel = jnp.logical_and(neg_mask, sim + MARGIN > min_pos)

    # Single fused exponential; coefficient is one select (perf review).
    # Unselected elements are dropped by select at the sum stage (never
    # multiplied), so an overflowed exp cannot produce inf*0 = NaN.
    coef = jnp.where(eq, jnp.float32(-scale_pos), jnp.float32(scale_neg))
    e = jnp.exp(coef * (sim - THRESH))
    pos_sum = jnp.sum(jnp.where(pos_sel, e, 0.0), axis=-1, keepdims=True)
    neg_sum = jnp.sum(jnp.where(neg_sel, e, 0.0), axis=-1, keepdims=True)
    # TODO(synk): if the vector-extended slot saturates on v7x, offload these
    # two masked sums to the MXU via dot with a ones (B_pad, 1) vector.

    pos_loss = (1.0 / scale_pos) * jnp.log(1.0 + pos_sum)
    neg_loss = (1.0 / scale_neg) * jnp.log(1.0 + neg_sum)

    # pos_sel nonempty <=> neg_sel nonempty <=> (min_pos - margin < max_neg);
    # the comparison is False whenever either raw pair set is empty because
    # min_pos=+inf / max_neg=-inf, so no explicit counts are needed.
    valid = jnp.logical_and(min_pos - MARGIN < max_neg, row_valid)
    row_loss = jnp.where(valid, pos_loss + neg_loss, 0.0)      # (TM, 1)

    out_ref[0, 0] = jnp.sum(row_loss)


def multi_similarity_loss(embedding1, embedding2, label1, label2,
                          scale_pos=2.0, scale_neg=40.0,
                          block_rows=256, matmul_dtype=jnp.bfloat16,
                          vmem_budget_bytes=None):
    feats = jnp.concatenate([embedding1, embedding2], axis=0).astype(jnp.float32)
    labels = jnp.concatenate([label1, label2], axis=0).astype(jnp.int32)
    assert feats.shape[0] == labels.shape[0]
    batch, dim = feats.shape

    d_pad = _round_up(dim, 128)
    itemsize = jnp.dtype(matmul_dtype).itemsize

    capacity = _vmem_capacity_bytes()
    if vmem_budget_bytes is None:
        # ~96 MiB working budget on 128-MiB chips (v5e/v6e), ~48 MiB on v7x.
        vmem_budget_bytes = (capacity * 3) // 4

    def _vmem_estimate(tm_):
        b_pad_ = _round_up(batch, tm_)
        return (d_pad * b_pad_ * itemsize       # resident RHS (single buffer)
                + 2 * tm_ * d_pad * itemsize    # LHS row tile (double buffer)
                + 8 * tm_ * b_pad_ * 4          # sim / mask / exp f32 slabs
                + 2 * tm_ * 128 * 4             # label column tiles (lane pad)
                + 8 * b_pad_ * 4)               # resident row labels

    # Row tile: default 256 matches the v6e/v7x 256-wide MXU M dimension;
    # auto-shrink (halving) only if the estimate exceeds the VMEM budget.
    tm = _round_up(min(block_rows, _round_up(batch, 8)), 8)
    while tm > 8 and _vmem_estimate(tm) > vmem_budget_bytes:
        tm = _round_up(max(8, tm // 2), 8)
    # TODO(synk): add a column-tiled fallback (second "arbitrary" grid axis
    # with online min/max + streaming sums) for batches whose (TM, B_pad)
    # slabs no longer fit VMEM even at TM=8 (~16-32K rows on v7x).
    b_pad = _round_up(batch, tm)
    num_blocks = b_pad // tm

    feats_cast = feats.astype(matmul_dtype)
    feats_rows = (jnp.zeros((b_pad, d_pad), matmul_dtype)
                  .at[:batch, :dim].set(feats_cast))            # LHS row tiles
    feats_t = (jnp.zeros((d_pad, b_pad), matmul_dtype)
               .at[:dim, :batch].set(feats_cast.T))             # resident RHS
    labels_p = jnp.zeros((b_pad,), jnp.int32).at[:batch].set(labels)
    lab_col = labels_p.reshape(b_pad, 1)
    lab_row = labels_p.reshape(1, b_pad)

    kernel = functools.partial(_ms_loss_kernel,
                               scale_pos=float(scale_pos),
                               scale_neg=float(scale_neg),
                               block_rows=tm,
                               batch=batch)

    cost = pl.CostEstimate(
        flops=2 * b_pad * b_pad * d_pad,
        transcendentals=b_pad * b_pad + 2 * b_pad,
        bytes_accessed=(2 * b_pad * d_pad * itemsize + 2 * b_pad * 4
                        + num_blocks * 4))

    # Scoped VMEM limit: estimate + headroom, clamped below physical per-TC.
    vmem_limit = int(min(max(_vmem_estimate(tm) * 5 // 4, 32 * 2**20),
                         capacity - 2 * 2**20))

    def _call(single_buffer_resident):
        const_kwargs = ({"pipeline_mode": pl.Buffered(1)}
                        if single_buffer_resident else {})
        in_specs = [
            pl.BlockSpec((tm, d_pad), lambda i: (i, 0)),        # LHS row tile
            pl.BlockSpec((d_pad, b_pad), lambda i: (0, 0),
                         **const_kwargs),                       # resident RHS
            pl.BlockSpec((tm, 1), lambda i: (i, 0)),            # label column
            pl.BlockSpec((1, b_pad), lambda i: (0, 0),
                         **const_kwargs),                       # label row
        ]
        return pl.pallas_call(
            kernel,
            grid=(num_blocks,),
            in_specs=in_specs,
            out_specs=pl.BlockSpec((1, 1), lambda i: (i, 0),
                                   memory_space=pltpu.MemorySpace.SMEM),
            out_shape=jax.ShapeDtypeStruct((num_blocks, 1), jnp.float32),
            compiler_params=pltpu.CompilerParams(
                dimension_semantics=("parallel",),
                vmem_limit_bytes=vmem_limit),
            cost_estimate=cost,
        )(feats_rows, feats_t, lab_col, lab_row)

    try:
        partials = _call(True)
    except Exception:
        # pl.Buffered(1) not accepted on this jax/Mosaic build -> default
        # double buffering (correctness identical, slightly more VMEM).
        partials = _call(False)

    return jnp.sum(partials) / jnp.float32(batch)


def _reference(emb1, emb2, lab1, lab2, sp, sn):
    # Pure numpy mirror of the PyTorch forward (rows whose mined pair sets are
    # empty are skipped, same as the kernel).
    feats = np.concatenate([np.asarray(emb1), np.asarray(emb2)], axis=0)
    labels = np.concatenate([np.asarray(lab1), np.asarray(lab2)], axis=0)
    B = feats.shape[0]
    sim = feats @ feats.T
    losses = []
    for i in range(B):
        pos = sim[i][labels == labels[i]]
        pos = pos[pos < 1 - EPSILON]
        neg = sim[i][labels != labels[i]]
        if pos.size == 0 or neg.size == 0:
            continue
        neg_sel = neg[neg + MARGIN > pos.min()]
        pos_sel = pos[pos - MARGIN < neg.max()]
        if neg_sel.size < 1 or pos_sel.size < 1:
            continue
        p = 1.0 / sp * np.log(1 + np.sum(np.exp(-sp * (pos_sel - THRESH))))
        n = 1.0 / sn * np.log(1 + np.sum(np.exp(sn * (neg_sel - THRESH))))
        losses.append(p + n)
    if not losses:
        return np.float32(0.0)
    return np.float32(sum(losses) / B)


if __name__ == "__main__":
    key = jax.random.PRNGKey(0)
    k1, k2, k3, k4 = jax.random.split(key, 4)
    N, D = 4, 32  # batch per branch, embedding size -> B = 2N = 8

    emb1 = jax.random.normal(k1, (N, D), jnp.float32)
    emb2 = jax.random.normal(k2, (N, D), jnp.float32)
    # L2-normalize inputs (typical metric-learning usage, keeps exp() finite).
    emb1 = emb1 / jnp.linalg.norm(emb1, axis=-1, keepdims=True)
    emb2 = emb2 / jnp.linalg.norm(emb2, axis=-1, keepdims=True)
    lab1 = jax.random.randint(k3, (N,), 0, 3, jnp.int32)
    lab2 = jax.random.randint(k4, (N,), 0, 3, jnp.int32)

    scale_pos, scale_neg = 2.0, 40.0

    # f32 matmul path: exact match against the reference.
    loss_f32 = multi_similarity_loss(emb1, emb2, lab1, lab2, scale_pos,
                                     scale_neg, matmul_dtype=jnp.float32)
    jax.block_until_ready(loss_f32)
    ref = _reference(emb1, emb2, lab1, lab2, scale_pos, scale_neg)
    assert np.allclose(np.asarray(loss_f32), ref, atol=1e-4, rtol=1e-4), (
        loss_f32, ref)

    # Default path (bf16 Gram matmul, f32 accumulation): MXU-peak option.
    # bf16 rounding can flip threshold-adjacent pair selection, so it is
    # validated for finiteness rather than bit-matched to the f32 reference.
    loss_bf16 = multi_similarity_loss(emb1, emb2, lab1, lab2,
                                      scale_pos, scale_neg)
    jax.block_until_ready(loss_bf16)
    assert np.isfinite(np.asarray(loss_bf16))

    print("KERNEL_OK")
</pallas_src>

<mosaic_0001>
module attributes {stable_mosaic.version = 11 : i64} {
  func.func @_ms_loss_kernel(%arg0: i32, %arg1: memref<8x128xf32, #tpu.memory_space<vmem>>, %arg2: memref<128x8xf32, #tpu.memory_space<vmem>>, %arg3: memref<8x1xi32, #tpu.memory_space<vmem>>, %arg4: memref<1x8xi32, #tpu.memory_space<vmem>>, %arg5: memref<1x1xf32, #tpu.memory_space<smem>>) attributes {dimension_semantics = [#tpu.dimension_semantics<parallel>], iteration_bounds = array<i64: 1>, scalar_prefetch = 0 : i64, scratch_operands = 0 : i64, tpu.core_type = #tpu.core_type<tc>, window_params = [{transform_indices = @transform_0, window_bounds = array<i64: 8, 128>}, {pipeline_mode = #tpu.pipeline_mode<synchronous>, transform_indices = @transform_1, window_bounds = array<i64: 128, 8>}, {transform_indices = @transform_2, window_bounds = array<i64: 8, 1>}, {pipeline_mode = #tpu.pipeline_mode<synchronous>, transform_indices = @transform_3, window_bounds = array<i64: 1, 8>}, {transform_indices = @transform_4, window_bounds = array<i64: 1, 1>}]} {
    %c8_i32 = arith.constant 8 : i32
    %0 = arith.muli %arg0, %c8_i32 : i32
    %c0 = arith.constant 0 : index
    %c0_0 = arith.constant 0 : index
    %1 = vector.load %arg1[%c0, %c0_0] : memref<8x128xf32, #tpu.memory_space<vmem>>, vector<8x128xf32>
    %c0_1 = arith.constant 0 : index
    %c0_2 = arith.constant 0 : index
    %2 = vector.load %arg2[%c0_1, %c0_2] : memref<128x8xf32, #tpu.memory_space<vmem>>, vector<128x8xf32>
    %cst = arith.constant dense<0.000000e+00> : vector<8x8xf32>
    %3 = tpu.matmul %1, %2, %cst {dimension_numbers = #tpu.dot_dimension_numbers<[1], [0], [0], [1], [0, 0, 1, 1], [], []>} : vector<8x128xf32>, vector<128x8xf32>, vector<8x8xf32> -> vector<8x8xf32>
    %4 = tpu.iota {dimensions = array<i32: 1>} : vector<1x8xi32>
    %c8_i32_3 = arith.constant 8 : i32
    %5 = vector.broadcast %c8_i32_3 : i32 to vector<1x8xi32>
    %6 = arith.cmpi slt, %4, %5 : vector<1x8xi32>
    %7 = tpu.iota {dimensions = array<i32: 0>} : vector<8x1xi32>
    %8 = vector.broadcast %0 : i32 to vector<8x1xi32>
    %9 = arith.addi %7, %8 : vector<8x1xi32>
    %c8_i32_4 = arith.constant 8 : i32
    %10 = vector.broadcast %c8_i32_4 : i32 to vector<8x1xi32>
    %11 = arith.cmpi slt, %9, %10 : vector<8x1xi32>
    %c0_5 = arith.constant 0 : index
    %c0_6 = arith.constant 0 : index
    %12 = vector.load %arg3[%c0_5, %c0_6] : memref<8x1xi32, #tpu.memory_space<vmem>>, vector<8x1xi32>
    %c0_7 = arith.constant 0 : index
    %c0_8 = arith.constant 0 : index
    %13 = vector.load %arg4[%c0_7, %c0_8] : memref<1x8xi32, #tpu.memory_space<vmem>>, vector<1x8xi32>
    %14 = vector.broadcast %12 : vector<8x1xi32> to vector<8x8xi32>
    %15 = vector.broadcast %13 : vector<1x8xi32> to vector<8x8xi32>
    %16 = arith.cmpi eq, %14, %15 : vector<8x8xi32>
    %cst_9 = arith.constant 0.999989986 : f32
    %17 = vector.broadcast %cst_9 : f32 to vector<8x8xf32>
    %18 = arith.cmpf olt, %3, %17 : vector<8x8xf32>
    %19 = arith.andi %16, %18 : vector<8x8xi1>
    %20 = vector.broadcast %6 : vector<1x8xi1> to vector<8x8xi1>
    %21 = arith.andi %19, %20 : vector<8x8xi1>
    %cst_10 = arith.constant dense<true> : vector<8x8xi1>
    %22 = arith.xori %16, %cst_10 : vector<8x8xi1>
    %23 = vector.broadcast %6 : vector<1x8xi1> to vector<8x8xi1>
    %24 = arith.andi %22, %23 : vector<8x8xi1>
    %cst_11 = arith.constant 0x7F800000 : f32
    %25 = vector.broadcast %cst_11 : f32 to vector<8x8xf32>
    %26 = arith.select %21, %3, %25 : vector<8x8xi1>, vector<8x8xf32>
    %cst_12 = arith.constant dense<0x7F800000> : vector<8xf32>
    %27 = vector.multi_reduction <minimumf>, %26, %cst_12 [1] : vector<8x8xf32> to vector<8xf32>
    %28 = vector.shape_cast %27 : vector<8xf32> to vector<8x1xf32>
    %cst_13 = arith.constant 0.000000e+00 : f32
    %cst_14 = arith.constant 0x7F800000 : f32
    %29 = arith.subf %cst_13, %cst_14 : f32
    %30 = vector.broadcast %29 : f32 to vector<8x8xf32>
    %31 = arith.select %24, %3, %30 : vector<8x8xi1>, vector<8x8xf32>
    %cst_15 = arith.constant dense<0xFF800000> : vector<8xf32>
    %32 = vector.multi_reduction <maximumf>, %31, %cst_15 [1] : vector<8x8xf32> to vector<8xf32>
    %33 = vector.shape_cast %32 : vector<8xf32> to vector<8x1xf32>
    %cst_16 = arith.constant 1.000000e-01 : f32
    %34 = vector.broadcast %cst_16 : f32 to vector<8x8xf32>
    %35 = arith.subf %3, %34 : vector<8x8xf32>
    %36 = vector.broadcast %33 : vector<8x1xf32> to vector<8x8xf32>
    %37 = arith.cmpf olt, %35, %36 : vector<8x8xf32>
    %38 = arith.andi %21, %37 : vector<8x8xi1>
    %cst_17 = arith.constant 1.000000e-01 : f32
    %39 = vector.broadcast %cst_17 : f32 to vector<8x8xf32>
    %40 = arith.addf %3, %39 : vector<8x8xf32>
    %41 = vector.broadcast %28 : vector<8x1xf32> to vector<8x8xf32>
    %42 = arith.cmpf ogt, %40, %41 : vector<8x8xf32>
    %43 = arith.andi %24, %42 : vector<8x8xi1>
    %cst_18 = arith.constant -2.000000e+00 : f32
    %cst_19 = arith.constant 4.000000e+01 : f32
    %44 = vector.broadcast %cst_18 : f32 to vector<8x8xf32>
    %45 = vector.broadcast %cst_19 : f32 to vector<8x8xf32>
    %46 = arith.select %16, %44, %45 : vector<8x8xi1>, vector<8x8xf32>
    %cst_20 = arith.constant 5.000000e-01 : f32
    %47 = vector.broadcast %cst_20 : f32 to vector<8x8xf32>
    %48 = arith.subf %3, %47 : vector<8x8xf32>
    %49 = arith.mulf %46, %48 : vector<8x8xf32>
    %50 = math.exp %49 : vector<8x8xf32>
    %cst_21 = arith.constant 0.000000e+00 : f32
    %51 = vector.broadcast %cst_21 : f32 to vector<8x8xf32>
    %52 = arith.select %38, %50, %51 : vector<8x8xi1>, vector<8x8xf32>
    %cst_22 = arith.constant dense<0.000000e+00> : vector<8xf32>
    %53 = vector.multi_reduction <add>, %52, %cst_22 [1] : vector<8x8xf32> to vector<8xf32>
    %54 = vector.shape_cast %53 : vector<8xf32> to vector<8x1xf32>
    %cst_23 = arith.constant 0.000000e+00 : f32
    %55 = vector.broadcast %cst_23 : f32 to vector<8x8xf32>
    %56 = arith.select %43, %50, %55 : vector<8x8xi1>, vector<8x8xf32>
    %cst_24 = arith.constant dense<0.000000e+00> : vector<8xf32>
    %57 = vector.multi_reduction <add>, %56, %cst_24 [1] : vector<8x8xf32> to vector<8xf32>
    %58 = vector.shape_cast %57 : vector<8xf32> to vector<8x1xf32>
    %cst_25 = arith.constant 1.000000e+00 : f32
    %59 = vector.broadcast %cst_25 : f32 to vector<8x1xf32>
    %60 = arith.addf %59, %54 : vector<8x1xf32>
    %61 = math.log %60 : vector<8x1xf32>
    %cst_26 = arith.constant 5.000000e-01 : f32
    %62 = vector.broadcast %cst_26 : f32 to vector<8x1xf32>
    %63 = arith.mulf %62, %61 : vector<8x1xf32>
    %cst_27 = arith.constant 1.000000e+00 : f32
    %64 = vector.broadcast %cst_27 : f32 to vector<8x1xf32>
    %65 = arith.addf %64, %58 : vector<8x1xf32>
    %66 = math.log %65 : vector<8x1xf32>
    %cst_28 = arith.constant 2.500000e-02 : f32
    %67 = vector.broadcast %cst_28 : f32 to vector<8x1xf32>
    %68 = arith.mulf %67, %66 : vector<8x1xf32>
    %cst_29 = arith.constant 1.000000e-01 : f32
    %69 = vector.broadcast %cst_29 : f32 to vector<8x1xf32>
    %70 = arith.subf %28, %69 : vector<8x1xf32>
    %71 = arith.cmpf olt, %70, %33 : vector<8x1xf32>
    %72 = arith.andi %71, %11 : vector<8x1xi1>
    %73 = arith.addf %63, %68 : vector<8x1xf32>
    %cst_30 = arith.constant 0.000000e+00 : f32
    %74 = vector.broadcast %cst_30 : f32 to vector<8x1xf32>
    %75 = arith.select %72, %73, %74 : vector<8x1xi1>, vector<8x1xf32>
    %76 = vector.shape_cast %75 : vector<8x1xf32> to vector<1x8x1xf32>
    %cst_31 = arith.constant dense<0.000000e+00> : vector<1xf32>
    %77 = vector.multi_reduction <add>, %76, %cst_31 [1, 2] : vector<1x8x1xf32> to vector<1xf32>
    %78 = vector.shape_cast %77 : vector<1xf32> to vector<1x1x1xf32>
    %79 = vector.extract %78[0, 0, 0] : f32 from vector<1x1x1xf32>
    %c0_32 = arith.constant 0 : index
    %c0_33 = arith.constant 0 : index
    %80 = memref.load %arg5[%c0_32, %c0_33] : memref<1x1xf32, #tpu.memory_space<smem>>
    memref.store %79, %arg5[%c0_32, %c0_33] : memref<1x1xf32, #tpu.memory_space<smem>>
    return
  }
  func.func @transform_0(%arg0: i32) -> (i32, i32) {
    %c0_i32 = arith.constant 0 : i32
    %c0_i32_0 = arith.constant 0 : i32
    return %arg0, %c0_i32 : i32, i32
  }
  func.func @transform_1(%arg0: i32) -> (i32, i32) {
    %c0_i32 = arith.constant 0 : i32
    %c0_i32_0 = arith.constant 0 : i32
    %c0_i32_1 = arith.constant 0 : i32
    return %c0_i32, %c0_i32_0 : i32, i32
  }
  func.func @transform_2(%arg0: i32) -> (i32, i32) {
    %c0_i32 = arith.constant 0 : i32
    %c0_i32_0 = arith.constant 0 : i32
    return %arg0, %c0_i32 : i32, i32
  }
  func.func @transform_3(%arg0: i32) -> (i32, i32) {
    %c0_i32 = arith.constant 0 : i32
    %c0_i32_0 = arith.constant 0 : i32
    %c0_i32_1 = arith.constant 0 : i32
    return %c0_i32, %c0_i32_0 : i32, i32
  }
  func.func @transform_4(%arg0: i32) -> (i32, i32) {
    %c0_i32 = arith.constant 0 : i32
    %c0_i32_0 = arith.constant 0 : i32
    return %arg0, %c0_i32 : i32, i32
  }
}

module attributes {stable_mosaic.version = 11 : i64} {
  func.func @_ms_loss_kernel(%arg0: i32, %arg1: memref<8x128xf32, #tpu.memory_space<vmem>>, %arg2: memref<128x8xf32, #tpu.memory_space<vmem>>, %arg3: memref<8x1xi32, #tpu.memory_space<vmem>>, %arg4: memref<1x8xi32, #tpu.memory_space<vmem>>, %arg5: memref<1x1xf32, #tpu.memory_space<smem>>) attributes {dimension_semantics = [#tpu.dimension_semantics<parallel>], iteration_bounds = array<i64: 1>, scalar_prefetch = 0 : i64, scratch_operands = 0 : i64, tpu.core_type = #tpu.core_type<tc>, window_params = [{transform_indices = @transform_0, window_bounds = array<i64: 8, 128>}, {pipeline_mode = #tpu.pipeline_mode<synchronous>, transform_indices = @transform_1, window_bounds = array<i64: 128, 8>}, {transform_indices = @transform_2, window_bounds = array<i64: 8, 1>}, {pipeline_mode = #tpu.pipeline_mode<synchronous>, transform_indices = @transform_3, window_bounds = array<i64: 1, 8>}, {transform_indices = @transform_4, window_bounds = array<i64: 1, 1>}]} {
    %c8_i32 = arith.constant 8 : i32
    %0 = arith.muli %arg0, %c8_i32 : i32
    %c0 = arith.constant 0 : index
    %c0_0 = arith.constant 0 : index
    %1 = vector.load %arg1[%c0, %c0_0] : memref<8x128xf32, #tpu.memory_space<vmem>>, vector<8x128xf32>
    %c0_1 = arith.constant 0 : index
    %c0_2 = arith.constant 0 : index
    %2 = vector.load %arg2[%c0_1, %c0_2] : memref<128x8xf32, #tpu.memory_space<vmem>>, vector<128x8xf32>
    %cst = arith.constant dense<0.000000e+00> : vector<8x8xf32>
    %3 = tpu.matmul %1, %2, %cst {dimension_numbers = #tpu.dot_dimension_numbers<[1], [0], [0], [1], [0, 0, 1, 1], [], []>} : vector<8x128xf32>, vector<128x8xf32>, vector<8x8xf32> -> vector<8x8xf32>
    %4 = tpu.iota {dimensions = array<i32: 1>} : vector<1x8xi32>
    %c8_i32_3 = arith.constant 8 : i32
    %5 = vector.broadcast %c8_i32_3 : i32 to vector<1x8xi32>
    %6 = arith.cmpi slt, %4, %5 : vector<1x8xi32>
    %7 = tpu.iota {dimensions = array<i32: 0>} : vector<8x1xi32>
    %8 = vector.broadcast %0 : i32 to vector<8x1xi32>
    %9 = arith.addi %7, %8 : vector<8x1xi32>
    %c8_i32_4 = arith.constant 8 : i32
    %10 = vector.broadcast %c8_i32_4 : i32 to vector<8x1xi32>
    %11 = arith.cmpi slt, %9, %10 : vector<8x1xi32>
    %c0_5 = arith.constant 0 : index
    %c0_6 = arith.constant 0 : index
    %12 = vector.load %arg3[%c0_5, %c0_6] : memref<8x1xi32, #tpu.memory_space<vmem>>, vector<8x1xi32>
    %c0_7 = arith.constant 0 : index
    %c0_8 = arith.constant 0 : index
    %13 = vector.load %arg4[%c0_7, %c0_8] : memref<1x8xi32, #tpu.memory_space<vmem>>, vector<1x8xi32>
    %14 = vector.broadcast %12 : vector<8x1xi32> to vector<8x8xi32>
    %15 = vector.broadcast %13 : vector<1x8xi32> to vector<8x8xi32>
    %16 = arith.cmpi eq, %14, %15 : vector<8x8xi32>
    %cst_9 = arith.constant 0.999989986 : f32
    %17 = vector.broadcast %cst_9 : f32 to vector<8x8xf32>
    %18 = arith.cmpf olt, %3, %17 : vector<8x8xf32>
    %19 = arith.andi %16, %18 : vector<8x8xi1>
    %20 = vector.broadcast %6 : vector<1x8xi1> to vector<8x8xi1>
    %21 = arith.andi %19, %20 : vector<8x8xi1>
    %cst_10 = arith.constant dense<true> : vector<8x8xi1>
    %22 = arith.xori %16, %cst_10 : vector<8x8xi1>
    %23 = vector.broadcast %6 : vector<1x8xi1> to vector<8x8xi1>
    %24 = arith.andi %22, %23 : vector<8x8xi1>
    %cst_11 = arith.constant 0x7F800000 : f32
    %25 = vector.broadcast %cst_11 : f32 to vector<8x8xf32>
    %26 = arith.select %21, %3, %25 : vector<8x8xi1>, vector<8x8xf32>
    %cst_12 = arith.constant dense<0x7F800000> : vector<8xf32>
    %27 = vector.multi_reduction <minimumf>, %26, %cst_12 [1] : vector<8x8xf32> to vector<8xf32>
    %28 = vector.shape_cast %27 : vector<8xf32> to vector<8x1xf32>
    %cst_13 = arith.constant 0.000000e+00 : f32
    %cst_14 = arith.constant 0x7F800000 : f32
    %29 = arith.subf %cst_13, %cst_14 : f32
    %30 = vector.broadcast %29 : f32 to vector<8x8xf32>
    %31 = arith.select %24, %3, %30 : vector<8x8xi1>, vector<8x8xf32>
    %cst_15 = arith.constant dense<0xFF800000> : vector<8xf32>
    %32 = vector.multi_reduction <maximumf>, %31, %cst_15 [1] : vector<8x8xf32> to vector<8xf32>
    %33 = vector.shape_cast %32 : vector<8xf32> to vector<8x1xf32>
    %cst_16 = arith.constant 1.000000e-01 : f32
    %34 = vector.broadcast %cst_16 : f32 to vector<8x8xf32>
    %35 = arith.subf %3, %34 : vector<8x8xf32>
    %36 = vector.broadcast %33 : vector<8x1xf32> to vector<8x8xf32>
    %37 = arith.cmpf olt, %35, %36 : vector<8x8xf32>
    %38 = arith.andi %21, %37 : vector<8x8xi1>
    %cst_17 = arith.constant 1.000000e-01 : f32
    %39 = vector.broadcast %cst_17 : f32 to vector<8x8xf32>
    %40 = arith.addf %3, %39 : vector<8x8xf32>
    %41 = vector.broadcast %28 : vector<8x1xf32> to vector<8x8xf32>
    %42 = arith.cmpf ogt, %40, %41 : vector<8x8xf32>
    %43 = arith.andi %24, %42 : vector<8x8xi1>
    %cst_18 = arith.constant -2.000000e+00 : f32
    %cst_19 = arith.constant 4.000000e+01 : f32
    %44 = vector.broadcast %cst_18 : f32 to vector<8x8xf32>
    %45 = vector.broadcast %cst_19 : f32 to vector<8x8xf32>
    %46 = arith.select %16, %44, %45 : vector<8x8xi1>, vector<8x8xf32>
    %cst_20 = arith.constant 5.000000e-01 : f32
    %47 = vector.broadcast %cst_20 : f32 to vector<8x8xf32>
    %48 = arith.subf %3, %47 : vector<8x8xf32>
    %49 = arith.mulf %46, %48 : vector<8x8xf32>
    %50 = math.exp %49 : vector<8x8xf32>
    %cst_21 = arith.constant 0.000000e+00 : f32
    %51 = vector.broadcast %cst_21 : f32 to vector<8x8xf32>
    %52 = arith.select %38, %50, %51 : vector<8x8xi1>, vector<8x8xf32>
    %cst_22 = arith.constant dense<0.000000e+00> : vector<8xf32>
    %53 = vector.multi_reduction <add>, %52, %cst_22 [1] : vector<8x8xf32> to vector<8xf32>
    %54 = vector.shape_cast %53 : vector<8xf32> to vector<8x1xf32>
    %cst_23 = arith.constant 0.000000e+00 : f32
    %55 = vector.broadcast %cst_23 : f32 to vector<8x8xf32>
    %56 = arith.select %43, %50, %55 : vector<8x8xi1>, vector<8x8xf32>
    %cst_24 = arith.constant dense<0.000000e+00> : vector<8xf32>
    %57 = vector.multi_reduction <add>, %56, %cst_24 [1] : vector<8x8xf32> to vector<8xf32>
    %58 = vector.shape_cast %57 : vector<8xf32> to vector<8x1xf32>
    %cst_25 = arith.constant 1.000000e+00 : f32
    %59 = vector.broadcast %cst_25 : f32 to vector<8x1xf32>
    %60 = arith.addf %59, %54 : vector<8x1xf32>
    %61 = math.log %60 : vector<8x1xf32>
    %cst_26 = arith.constant 5.000000e-01 : f32
    %62 = vector.broadcast %cst_26 : f32 to vector<8x1xf32>
    %63 = arith.mulf %62, %61 : vector<8x1xf32>
    %cst_27 = arith.constant 1.000000e+00 : f32
    %64 = vector.broadcast %cst_27 : f32 to vector<8x1xf32>
    %65 = arith.addf %64, %58 : vector<8x1xf32>
    %66 = math.log %65 : vector<8x1xf32>
    %cst_28 = arith.constant 2.500000e-02 : f32
    %67 = vector.broadcast %cst_28 : f32 to vector<8x1xf32>
    %68 = arith.mulf %67, %66 : vector<8x1xf32>
    %cst_29 = arith.constant 1.000000e-01 : f32
    %69 = vector.broadcast %cst_29 : f32 to vector<8x1xf32>
    %70 = arith.subf %28, %69 : vector<8x1xf32>
    %71 = arith.cmpf olt, %70, %33 : vector<8x1xf32>
    %72 = arith.andi %71, %11 : vector<8x1xi1>
    %73 = arith.addf %63, %68 : vector<8x1xf32>
    %cst_30 = arith.constant 0.000000e+00 : f32
    %74 = vector.broadcast %cst_30 : f32 to vector<8x1xf32>
    %75 = arith.select %72, %73, %74 : vector<8x1xi1>, vector<8x1xf32>
    %76 = vector.shape_cast %75 : vector<8x1xf32> to vector<1x8x1xf32>
    %cst_31 = arith.constant dense<0.000000e+00> : vector<1xf32>
    %77 = vector.multi_reduction <add>, %76, %cst_31 [1, 2] : vector<1x8x1xf32> to vector<1xf32>
    %78 = vector.shape_cast %77 : vector<1xf32> to vector<1x1x1xf32>
    %79 = vector.extract %78[0, 0, 0] : f32 from vector<1x1x1xf32>
    %c0_32 = arith.constant 0 : index
    %c0_33 = arith.constant 0 : index
    %80 = memref.load %arg5[%c0_32, %c0_33] : memref<1x1xf32, #tpu.memory_space<smem>>
    memref.store %79, %arg5[%c0_32, %c0_33] : memref<1x1xf32, #tpu.memory_space<smem>>
    return
  }
  func.func @transform_0(%arg0: i32) -> (i32, i32) {
    %c0_i32 = arith.constant 0 : i32
    %c0_i32_0 = arith.constant 0 : i32
    return %arg0, %c0_i32 : i32, i32
  }
  func.func @transform_1(%arg0: i32) -> (i32, i32) {
    %c0_i32 = arith.constant 0 : i32
    %c0_i32_0 = arith.constant 0 : i32
    %c0_i32_1 = arith.constant 0 : i32
    return %c0_i32, %c0_i32_0 : i32, i32
  }
  func.func @transform_2(%arg0: i32) -> (i32, i32) {
    %c0_i32 = arith.constant 0 : i32
    %c0_i32_0 = arith.constant 0 : i32
    return %arg0, %c0_i32 : i32, i32
  }
  func.func @transform_3(%arg0: i32) -> (i32, i32) {
    %c0_i32 = arith.constant 0 : i32
    %c0_i32_0 = arith.constant 0 : i32
    %c0_i32_1 = arith.constant 0 : i32
    return %c0_i32, %c0_i32_0 : i32, i32
  }
  func.func @transform_4(%arg0: i32) -> (i32, i32) {
    %c0_i32 = arith.constant 0 : i32
    %c0_i32_0 = arith.constant 0 : i32
    return %arg0, %c0_i32 : i32, i32
  }
}

</mosaic_0001>

<llo_original>
// kernel: tpu_custom_call.1
$region0: #{tpu_custom_call.1}
  #allocation0 [shape = 'u32[]', space=smem, size = 0x4, offset = 0x4, fixed_abs, tag = 'smem constant byte address 0x4 - core index']
  #allocation1 [shape = 'u32[144,128]{1,0:T(1,128)}', space=vmem, size = 0x12000, scoped, tag = 'internal scratch']
  %s0 = inlined_call_operand.vmem [shape: f32[8,128], index: 0, kind: input, shape index: {}]
  %s1 = inlined_call_operand.vmem [shape: f32[128,8], index: 1, kind: input, shape index: {}]
  %s2 = inlined_call_operand.vmem [shape: s32[8,1], index: 2, kind: input, shape index: {}]
  %s3 = inlined_call_operand.vmem [shape: s32[1,8], index: 3, kind: input, shape index: {}]
  %s4 = inlined_call_operand.hbm [shape: f32[1,1], index: 4, kind: output, shape index: {}]
  %s5 = sld [smem:[#allocation0]]
  $region26: #{tpu_custom_call.1} parent=0
    _
  %s7 = ssub.s32 1, %s5
  %s8 = scalar_select 0, %s7, %s5
  $region1: #{tpu_custom_call.1} parent=0
    #allocation2 [shape = 'u8[512]{0}', space=smem, size = 0x200, scoped, tag = 'output window, operand 0, single buffered']
    #allocation3 [shape = 's32[1]{0}', space=sflag, size = 0x4, scoped, tag = 'scoped memory for tpu_custom_call.1']
    %9 = vsyncpa [#allocation3], 0
    // Predicated region
    $region2: #{tpu_custom_call.1} parent=1 // pred_check
      _
    $region3: #{tpu_custom_call.1} parent=1 // pred_check_branch
      %11 = sbr.rel (0) target = $region5
    $region4: #{tpu_custom_call.1} parent=1 // pred_region
      _
    $region5: #{tpu_custom_call.1} parent=1 // pred_fallthru
      _
    // Predicated region
    $region6: #{tpu_custom_call.1} parent=1 // pred_check
      _
    $region7: #{tpu_custom_call.1} parent=1 // pred_check_branch
      %13 = sbr.rel (0) target = $region9
    $region8: #{tpu_custom_call.1} parent=1 // pred_region
      _
    $region9: #{tpu_custom_call.1} parent=1 // pred_fallthru
      _
    // Predicated region
    $region10: #{tpu_custom_call.1} parent=1 // pred_check
      _
    $region11: #{tpu_custom_call.1} parent=1 // pred_check_branch
      %15 = sbr.rel (0) target = $region13
    $region12: #{tpu_custom_call.1} parent=1 // pred_region
      _
    $region13: #{tpu_custom_call.1} parent=1 // pred_fallthru
      _
    // Predicated region
    $region14: #{tpu_custom_call.1} parent=1 // pred_check
      _
    $region15: #{tpu_custom_call.1} parent=1 // pred_check_branch
      %17 = sbr.rel (0) target = $region17
    $region16: #{tpu_custom_call.1} parent=1 // pred_region
      _
    $region17: #{tpu_custom_call.1} parent=1 // pred_fallthru
      _
    %s18 = smul.u32 0, 8
    %v19 = vld [vmem:[%s0] sm:$0xff]
    %v20 = vld [vmem:[%s1] sm:$0xff]
    %v21 = vld [vmem:[%s1 + $0x8] sm:$0xff]
    %v22 = vld [vmem:[%s1 + $0x10] sm:$0xff]
    %v23 = vld [vmem:[%s1 + $0x18] sm:$0xff]
    %v24 = vld [vmem:[%s1 + $0x20] sm:$0xff]
    %v25 = vld [vmem:[%s1 + $0x28] sm:$0xff]
    %v26 = vld [vmem:[%s1 + $0x30] sm:$0xff]
    %v27 = vld [vmem:[%s1 + $0x38] sm:$0xff]
    %v28 = vld [vmem:[%s1 + $0x40] sm:$0xff]
    %v29 = vld [vmem:[%s1 + $0x48] sm:$0xff]
    %v30 = vld [vmem:[%s1 + $0x50] sm:$0xff]
    %v31 = vld [vmem:[%s1 + $0x58] sm:$0xff]
    %v32 = vld [vmem:[%s1 + $0x60] sm:$0xff]
    %v33 = vld [vmem:[%s1 + $0x68] sm:$0xff]
    %v34 = vld [vmem:[%s1 + $0x70] sm:$0xff]
    %v35 = vld [vmem:[%s1 + $0x78] sm:$0xff]
    %36 = vmatprep.subr.mxu0 0.0
    %37 = vmatpush1.msra.mxu0 %v35
    %38 = vmatprep.subr.mxu0 0.0
    %39 = vmatpush1.msra.mxu0 %v34
    %40 = vmatprep.subr.mxu0 0.0
    %41 = vmatpush1.msra.mxu0 %v33
    %42 = vmatprep.subr.mxu0 0.0
    %43 = vmatpush1.msra.mxu0 %v32
    %44 = vmatprep.subr.mxu0 0.0
    %45 = vmatpush1.msra.mxu0 %v31
    %46 = vmatprep.subr.mxu0 0.0
    %47 = vmatpush1.msra.mxu0 %v30
    %48 = vmatprep.subr.mxu0 0.0
    %49 = vmatpush1.msra.mxu0 %v29
    %50 = vmatprep.subr.mxu0 0.0
    %51 = vmatpush1.msra.mxu0 %v28
    %52 = vmatprep.subr.mxu0 0.0
    %53 = vmatpush1.msra.mxu0 %v27
    %54 = vmatprep.subr.mxu0 0.0
    %55 = vmatpush1.msra.mxu0 %v26
    %56 = vmatprep.subr.mxu0 0.0
    %57 = vmatpush1.msra.mxu0 %v25
    %58 = vmatprep.subr.mxu0 0.0
    %59 = vmatpush1.msra.mxu0 %v24
    %60 = vmatprep.subr.mxu0 0.0
    %61 = vmatpush1.msra.mxu0 %v23
    %62 = vmatprep.subr.mxu0 0.0
    %63 = vmatpush1.msra.mxu0 %v22
    %64 = vmatprep.subr.mxu0 0.0
    %65 = vmatpush1.msra.mxu0 %v21
    %66 = vmatprep.subr.mxu0 0.0
    %67 = vmatpush1.msra.mxu0 %v20
    %68 = vmatprep.subr.mxu0 0.0
    %69 = vmatpush2.msra.mxu0 0.0
    %70 = vmatprep.subr.mxu0 0.0
    %71 = vmatpush2.msra.mxu0 0.0
    %72 = vmatprep.subr.mxu0 0.0
    %73 = vmatpush2.msra.mxu0 0.0
    %74 = vmatprep.subr.mxu0 0.0
    %75 = vmatpush2.msra.mxu0 0.0
    %76 = vmatprep.subr.mxu0 0.0
    %77 = vmatpush2.msra.mxu0 0.0
    %78 = vmatprep.subr.mxu0 0.0
    %79 = vmatpush2.msra.mxu0 0.0
    %80 = vmatprep.subr.mxu0 0.0
    %81 = vmatpush2.msra.mxu0 0.0
    %82 = vmatprep.subr.mxu0 0.0
    %83 = vmatpush2.msra.mxu0 0.0
    %84 = vmatprep.subr.mxu0 0.0
    %85 = vmatpush2.msra.mxu0 0.0
    %86 = vmatprep.subr.mxu0 0.0
    %87 = vmatpush2.msra.mxu0 0.0
    %88 = vmatprep.subr.mxu0 0.0
    %89 = vmatpush2.msra.mxu0 0.0
    %90 = vmatprep.subr.mxu0 0.0
    %91 = vmatpush2.msra.mxu0 0.0
    %92 = vmatprep.subr.mxu0 0.0
    %93 = vmatpush2.msra.mxu0 0.0
    %94 = vmatprep.subr.mxu0 0.0
    %95 = vmatpush2.msra.mxu0 0.0
    %96 = vmatprep.subr.mxu0 0.0
    %97 = vmatpush2.msra.mxu0 0.0
    %98 = vmatprep.subr.mxu0 0.0
    %99 = vmatpush2.msra.mxu0 0.0
    %100 = vmatprep.mubr.f32.mxu0 0.0
    %101 = vmatmul.mubr.f32.gmra.mxu0 %v19
    %v102 = vpop.f32.mrf.mxu0
    %v103 = vadd.f32 0.0, %v102
    %v104 = vpop.f32.mrf.mxu0
    %105 = vdwg.mxu0
    %v106 = vlaneseq
    %v107 = vand.u32 %v106, 127
    %vm108 = vcmp.lt.s32.totalorder %v107, 8
    %v109 = vlaneseq
    %v110 = vshrl.u32 %v109, 7
    %v111 = vstv %s18
    %v112 = vadd.s32 %v110, %v111
    %vm113 = vcmp.lt.s32.totalorder %v112, 8
    %v114 = vld [vmem:[%s2] sm:$0xff]
    %v115 = vld [vmem:[%s3] sm:$0x1]
    %116 = vset.pattern.permute.xlu0 0
    %117 = vperm.xlu0 %116, %v114
    %v118 = vpop.permute.xlu0 %117
    %v119 = vlaneseq
    %v120 = vshrl.u32 %v119, 7
    %v121 = vsub.s32 0, %v120
    %v122 = vrot.slane %v115, %v121
    %vm123 = vcmp.eq.s32.totalorder %v118, %v122
    %vm124 = vcmp.lt.f32.partialorder %v103, 0.99999
    %vm125 = vmand %vm123, %vm124
    %v126 = vsel %vm108, 1, 0
    %vm127 = vcmp.eq.s32.totalorder %v126, 1
    %vm128 = vmand %vm125, %vm127
    %vm129 = vmxor %vm123, 1
    %vm130 = vmand %vm129, %vm127
    %v131 = vsel %vm128, %v103, inf
    %vm132 = vcmask 64512
    %v133 = vsel %vm132, %v131, inf
    %134 = vmin.xlane.f32.xlu0 %v133
    %v135 = vpop.xlane.xlu0 %134
    %v136 = vsel %vm130, %v103, -inf
    %v137 = vsel %vm132, %v136, -inf
    %138 = vmax.xlane.f32.xlu0 %v137
    %v139 = vpop.xlane.xlu0 %138
    %v140 = vsub.f32 %v103, 0.1
    %vm141 = vcmp.lt.f32.partialorder %v140, %v139
    %vm142 = vmand %vm128, %vm141
    %v143 = vadd.f32 %v103, 0.1
    %vm144 = vcmp.gt.f32.partialorder %v143, %v135
    %vm145 = vmand %vm130, %vm144
    %v146 = vsel %vm123, -2.0, 40.0
    %v147 = vsub.f32 %v103, 0.5
    %v148 = vmul.f32 %v146, %v147
    %v149 = vmul.f32 %v148, 1.442695
    %v150 = vpow.pop %v149
    %v151 = vsel %vm142, %v150, 0.0
    %v152 = vsel %vm132, %v151, 0.0
    %153 = vadd.xlane.f32.xlu0 %v152
    %v154 = vpop.xlane.xlu0 %153
    %v155 = vsel %vm145, %v150, 0.0
    %v156 = vsel %vm132, %v155, 0.0
    %157 = vadd.xlane.f32.xlu0 %v156
    %v158 = vpop.xlane.xlu0 %157
    %v159 = vadd.f32 %v154, 1.0
    %v160 = vlog2.pop %v159
    %v161 = vmul.f32 %v160, 0.6931472
    %v162 = vmul.f32 %v161, 0.5
    %v163 = vadd.f32 %v158, 1.0
    %v164 = vlog2.pop %v163
    %v165 = vmul.f32 %v164, 0.6931472
    %v166 = vmul.f32 %v165, 0.025
    %v167 = vsub.f32 %v135, 0.1
    %vm168 = vcmp.lt.f32.partialorder %v167, %v139
    %vm169 = vmand %vm168, %vm113
    %v170 = vadd.f32 %v162, %v166
    %v171 = vsel %vm169, %v170, 0.0
    %vm172 = vcmask 7168
    %v173 = vsel %vm172, %v171, 0.0
    %174 = vadd.xlane.f32.xlu0 %v173
    %v175 = vpop.xlane.xlu0 %174
    %v176 = vrot.slane %v175, 4
    %v177 = vadd.f32 %v175, %v176
    %v178 = vrot.slane %v177, 2
    %v179 = vadd.f32 %v177, %v178
    %v180 = vrot.slane %v179, 1
    %v181 = vadd.f32 %v179, %v180
    %s182 = vtos %v181
    %s183 = scalar_lea.smem [#allocation2], 0
    %184 = sst [smem:[%s183]] %s182
    // Predicated region
    $region18: #{tpu_custom_call.1} parent=1 // pred_check
      _
    $region19: #{tpu_custom_call.1} parent=1 // pred_check_branch
      %186 = sbr.rel (0) target = $region21
    $region20: #{tpu_custom_call.1} parent=1 // pred_region
      %s188 = ssub.s32 16, 16
      %189 = vsyncadd [#allocation3], %s188
      %192 = dma.smem_to_hbm [#allocation2], 16, %s4, [#allocation3]
    $region21: #{tpu_custom_call.1} parent=1 // pred_fallthru
      _
    // Predicated region
    $region22: #{tpu_custom_call.1} parent=1 // pred_check
      _
    $region23: #{tpu_custom_call.1} parent=1 // pred_check_branch
      %194 = sbr.rel (0) target = $region25
    $region24: #{tpu_custom_call.1} parent=1 // pred_region
      %195 = dma.done [#allocation3], 16
    $region25: #{tpu_custom_call.1} parent=1 // pred_fallthru
      _
    %196 = sfence
    %197 = vsyncpa [#allocation3], 1

// kernel: tpu_custom_call.1
$region0: #{tpu_custom_call.1}
  #allocation0 [shape = 'u32[]', space=smem, size = 0x4, offset = 0x4, fixed_abs, tag = 'smem constant byte address 0x4 - core index']
  #allocation1 [shape = 'u32[144,128]{1,0:T(1,128)}', space=vmem, size = 0x12000, scoped, tag = 'internal scratch']
  %s0 = inlined_call_operand.vmem [shape: f32[8,128], index: 0, kind: input, shape index: {}]
  %s1 = inlined_call_operand.vmem [shape: f32[128,8], index: 1, kind: input, shape index: {}]
  %s2 = inlined_call_operand.vmem [shape: s32[8,1], index: 2, kind: input, shape index: {}]
  %s3 = inlined_call_operand.vmem [shape: s32[1,8], index: 3, kind: input, shape index: {}]
  %s4 = inlined_call_operand.hbm [shape: f32[1,1], index: 4, kind: output, shape index: {}]
  %s5 = sld [smem:[#allocation0]]
  $region26: #{tpu_custom_call.1} parent=0
    _
  %s7 = ssub.s32 1, %s5
  %s8 = scalar_select 0, %s7, %s5
  $region1: #{tpu_custom_call.1} parent=0
    #allocation2 [shape = 'u8[512]{0}', space=smem, size = 0x200, scoped, tag = 'output window, operand 0, single buffered']
    #allocation3 [shape = 's32[1]{0}', space=sflag, size = 0x4, scoped, tag = 'scoped memory for tpu_custom_call.1']
    %9 = vsyncpa [#allocation3], 0
    // Predicated region
    $region2: #{tpu_custom_call.1} parent=1 // pred_check
      _
    $region3: #{tpu_custom_call.1} parent=1 // pred_check_branch
      %11 = sbr.rel (0) target = $region5
    $region4: #{tpu_custom_call.1} parent=1 // pred_region
      _
    $region5: #{tpu_custom_call.1} parent=1 // pred_fallthru
      _
    // Predicated region
    $region6: #{tpu_custom_call.1} parent=1 // pred_check
      _
    $region7: #{tpu_custom_call.1} parent=1 // pred_check_branch
      %13 = sbr.rel (0) target = $region9
    $region8: #{tpu_custom_call.1} parent=1 // pred_region
      _
    $region9: #{tpu_custom_call.1} parent=1 // pred_fallthru
      _
    // Predicated region
    $region10: #{tpu_custom_call.1} parent=1 // pred_check
      _
    $region11: #{tpu_custom_call.1} parent=1 // pred_check_branch
      %15 = sbr.rel (0) target = $region13
    $region12: #{tpu_custom_call.1} parent=1 // pred_region
      _
    $region13: #{tpu_custom_call.1} parent=1 // pred_fallthru
      _
    // Predicated region
    $region14: #{tpu_custom_call.1} parent=1 // pred_check
      _
    $region15: #{tpu_custom_call.1} parent=1 // pred_check_branch
      %17 = sbr.rel (0) target = $region17
    $region16: #{tpu_custom_call.1} parent=1 // pred_region
      _
    $region17: #{tpu_custom_call.1} parent=1 // pred_fallthru
      _
    %s18 = smul.u32 0, 8
    %v19 = vld [vmem:[%s0] sm:$0xff]
    %v20 = vld [vmem:[%s1] sm:$0xff]
    %v21 = vld [vmem:[%s1 + $0x8] sm:$0xff]
    %v22 = vld [vmem:[%s1 + $0x10] sm:$0xff]
    %v23 = vld [vmem:[%s1 + $0x18] sm:$0xff]
    %v24 = vld [vmem:[%s1 + $0x20] sm:$0xff]
    %v25 = vld [vmem:[%s1 + $0x28] sm:$0xff]
    %v26 = vld [vmem:[%s1 + $0x30] sm:$0xff]
    %v27 = vld [vmem:[%s1 + $0x38] sm:$0xff]
    %v28 = vld [vmem:[%s1 + $0x40] sm:$0xff]
    %v29 = vld [vmem:[%s1 + $0x48] sm:$0xff]
    %v30 = vld [vmem:[%s1 + $0x50] sm:$0xff]
    %v31 = vld [vmem:[%s1 + $0x58] sm:$0xff]
    %v32 = vld [vmem:[%s1 + $0x60] sm:$0xff]
    %v33 = vld [vmem:[%s1 + $0x68] sm:$0xff]
    %v34 = vld [vmem:[%s1 + $0x70] sm:$0xff]
    %v35 = vld [vmem:[%s1 + $0x78] sm:$0xff]
    %36 = vmatprep.subr.mxu0 0.0
    %37 = vmatpush1.msra.mxu0 %v35
    %38 = vmatprep.subr.mxu0 0.0
    %39 = vmatpush1.msra.mxu0 %v34
    %40 = vmatprep.subr.mxu0 0.0
    %41 = vmatpush1.msra.mxu0 %v33
    %42 = vmatprep.subr.mxu0 0.0
    %43 = vmatpush1.msra.mxu0 %v32
    %44 = vmatprep.subr.mxu0 0.0
    %45 = vmatpush1.msra.mxu0 %v31
    %46 = vmatprep.subr.mxu0 0.0
    %47 = vmatpush1.msra.mxu0 %v30
    %48 = vmatprep.subr.mxu0 0.0
    %49 = vmatpush1.msra.mxu0 %v29
    %50 = vmatprep.subr.mxu0 0.0
    %51 = vmatpush1.msra.mxu0 %v28
    %52 = vmatprep.subr.mxu0 0.0
    %53 = vmatpush1.msra.mxu0 %v27
    %54 = vmatprep.subr.mxu0 0.0
    %55 = vmatpush1.msra.mxu0 %v26
    %56 = vmatprep.subr.mxu0 0.0
    %57 = vmatpush1.msra.mxu0 %v25
    %58 = vmatprep.subr.mxu0 0.0
    %59 = vmatpush1.msra.mxu0 %v24
    %60 = vmatprep.subr.mxu0 0.0
    %61 = vmatpush1.msra.mxu0 %v23
    %62 = vmatprep.subr.mxu0 0.0
    %63 = vmatpush1.msra.mxu0 %v22
    %64 = vmatprep.subr.mxu0 0.0
    %65 = vmatpush1.msra.mxu0 %v21
    %66 = vmatprep.subr.mxu0 0.0
    %67 = vmatpush1.msra.mxu0 %v20
    %68 = vmatprep.subr.mxu0 0.0
    %69 = vmatpush2.msra.mxu0 0.0
    %70 = vmatprep.subr.mxu0 0.0
    %71 = vmatpush2.msra.mxu0 0.0
    %72 = vmatprep.subr.mxu0 0.0
    %73 = vmatpush2.msra.mxu0 0.0
    %74 = vmatprep.subr.mxu0 0.0
    %75 = vmatpush2.msra.mxu0 0.0
    %76 = vmatprep.subr.mxu0 0.0
    %77 = vmatpush2.msra.mxu0 0.0
    %78 = vmatprep.subr.mxu0 0.0
    %79 = vmatpush2.msra.mxu0 0.0
    %80 = vmatprep.subr.mxu0 0.0
    %81 = vmatpush2.msra.mxu0 0.0
    %82 = vmatprep.subr.mxu0 0.0
    %83 = vmatpush2.msra.mxu0 0.0
    %84 = vmatprep.subr.mxu0 0.0
    %85 = vmatpush2.msra.mxu0 0.0
    %86 = vmatprep.subr.mxu0 0.0
    %87 = vmatpush2.msra.mxu0 0.0
    %88 = vmatprep.subr.mxu0 0.0
    %89 = vmatpush2.msra.mxu0 0.0
    %90 = vmatprep.subr.mxu0 0.0
    %91 = vmatpush2.msra.mxu0 0.0
    %92 = vmatprep.subr.mxu0 0.0
    %93 = vmatpush2.msra.mxu0 0.0
    %94 = vmatprep.subr.mxu0 0.0
    %95 = vmatpush2.msra.mxu0 0.0
    %96 = vmatprep.subr.mxu0 0.0
    %97 = vmatpush2.msra.mxu0 0.0
    %98 = vmatprep.subr.mxu0 0.0
    %99 = vmatpush2.msra.mxu0 0.0
    %100 = vmatprep.mubr.f32.mxu0 0.0
    %101 = vmatmul.mubr.f32.gmra.mxu0 %v19
    %v102 = vpop.f32.mrf.mxu0
    %v103 = vadd.f32 0.0, %v102
    %v104 = vpop.f32.mrf.mxu0
    %105 = vdwg.mxu0
    %v106 = vlaneseq
    %v107 = vand.u32 %v106, 127
    %vm108 = vcmp.lt.s32.totalorder %v107, 8
    %v109 = vlaneseq
    %v110 = vshrl.u32 %v109, 7
    %v111 = vstv %s18
    %v112 = vadd.s32 %v110, %v111
    %vm113 = vcmp.lt.s32.totalorder %v112, 8
    %v114 = vld [vmem:[%s2] sm:$0xff]
    %v115 = vld [vmem:[%s3] sm:$0x1]
    %116 = vset.pattern.permute.xlu0 0
    %117 = vperm.xlu0 %116, %v114
    %v118 = vpop.permute.xlu0 %117
    %v119 = vlaneseq
    %v120 = vshrl.u32 %v119, 7
    %v121 = vsub.s32 0, %v120
    %v122 = vrot.slane %v115, %v121
    %vm123 = vcmp.eq.s32.totalorder %v118, %v122
    %vm124 = vcmp.lt.f32.partialorder %v103, 0.99999
    %vm125 = vmand %vm123, %vm124
    %v126 = vsel %vm108, 1, 0
    %vm127 = vcmp.eq.s32.totalorder %v126, 1
    %vm128 = vmand %vm125, %vm127
    %vm129 = vmxor %vm123, 1
    %vm130 = vmand %vm129, %vm127
    %v131 = vsel %vm128, %v103, inf
    %vm132 = vcmask 64512
    %v133 = vsel %vm132, %v131, inf
    %134 = vmin.xlane.f32.xlu0 %v133
    %v135 = vpop.xlane.xlu0 %134
    %v136 = vsel %vm130, %v103, -inf
    %v137 = vsel %vm132, %v136, -inf
    %138 = vmax.xlane.f32.xlu0 %v137
    %v139 = vpop.xlane.xlu0 %138
    %v140 = vsub.f32 %v103, 0.1
    %vm141 = vcmp.lt.f32.partialorder %v140, %v139
    %vm142 = vmand %vm128, %vm141
    %v143 = vadd.f32 %v103, 0.1
    %vm144 = vcmp.gt.f32.partialorder %v143, %v135
    %vm145 = vmand %vm130, %vm144
    %v146 = vsel %vm123, -2.0, 40.0
    %v147 = vsub.f32 %v103, 0.5
    %v148 = vmul.f32 %v146, %v147
    %v149 = vmul.f32 %v148, 1.442695
    %v150 = vpow.pop %v149
    %v151 = vsel %vm142, %v150, 0.0
    %v152 = vsel %vm132, %v151, 0.0
    %153 = vadd.xlane.f32.xlu0 %v152
    %v154 = vpop.xlane.xlu0 %153
    %v155 = vsel %vm145, %v150, 0.0
    %v156 = vsel %vm132, %v155, 0.0
    %157 = vadd.xlane.f32.xlu0 %v156
    %v158 = vpop.xlane.xlu0 %157
    %v159 = vadd.f32 %v154, 1.0
    %v160 = vlog2.pop %v159
    %v161 = vmul.f32 %v160, 0.6931472
    %v162 = vmul.f32 %v161, 0.5
    %v163 = vadd.f32 %v158, 1.0
    %v164 = vlog2.pop %v163
    %v165 = vmul.f32 %v164, 0.6931472
    %v166 = vmul.f32 %v165, 0.025
    %v167 = vsub.f32 %v135, 0.1
    %vm168 = vcmp.lt.f32.partialorder %v167, %v139
    %vm169 = vmand %vm168, %vm113
    %v170 = vadd.f32 %v162, %v166
    %v171 = vsel %vm169, %v170, 0.0
    %vm172 = vcmask 7168
    %v173 = vsel %vm172, %v171, 0.0
    %174 = vadd.xlane.f32.xlu0 %v173
    %v175 = vpop.xlane.xlu0 %174
    %v176 = vrot.slane %v175, 4
    %v177 = vadd.f32 %v175, %v176
    %v178 = vrot.slane %v177, 2
    %v179 = vadd.f32 %v177, %v178
    %v180 = vrot.slane %v179, 1
    %v181 = vadd.f32 %v179, %v180
    %s182 = vtos %v181
    %s183 = scalar_lea.smem [#allocation2], 0
    %184 = sst [smem:[%s183]] %s182
    // Predicated region
    $region18: #{tpu_custom_call.1} parent=1 // pred_check
      _
    $region19: #{tpu_custom_call.1} parent=1 // pred_check_branch
      %186 = sbr.rel (0) target = $region21
    $region20: #{tpu_custom_call.1} parent=1 // pred_region
      %s188 = ssub.s32 16, 16
      %189 = vsyncadd [#allocation3], %s188
      %192 = dma.smem_to_hbm [#allocation2], 16, %s4, [#allocation3]
    $region21: #{tpu_custom_call.1} parent=1 // pred_fallthru
      _
    // Predicated region
    $region22: #{tpu_custom_call.1} parent=1 // pred_check
      _
    $region23: #{tpu_custom_call.1} parent=1 // pred_check_branch
      %194 = sbr.rel (0) target = $region25
    $region24: #{tpu_custom_call.1} parent=1 // pred_region
      %195 = dma.done [#allocation3], 16
    $region25: #{tpu_custom_call.1} parent=1 // pred_fallthru
      _
    %196 = sfence
    %197 = vsyncpa [#allocation3], 1

</llo_original>
